<compile_context>
chip_gen: v7x
topology: tpu7x:2x2x1
jax: 0.10.0
libtpu: 0.0.40
codegen_flags: <defaults>
</compile_context>

<pallas_src>
import functools

import jax
import jax.numpy as jnp
import numpy as np
from jax import lax
from jax.experimental import pallas as pl
from jax.experimental.pallas import tpu as pltpu


# Contract the last dim of both operands (A @ B.T) natively on the MXU.
_DIMNUMS = (((1,), (1,)), ((), ()))


def _round_up(x, m):
    return ((x + m - 1) // m) * m


def _vmem_capacity_bytes():
    try:
        return int(pltpu.get_tpu_info().vmem_capacity_bytes)
    except Exception:
        return 64 * 1024 * 1024  # conservative default: v7x per-core VMEM


def _pick_row_tile(batch_size, vmem_cap, align):
    """Row tile sized from a VMEM budget, preferring tiles that divide B.

    Per-step live temporaries are dominated by the (tile, 2B) f32 logits and
    their exp (~3 * tile * 2B * 4 bytes); budget ~capacity/5 for them
    (~12.8 MiB on v7x, ~25 MiB on v5e/v6e).
    """
    r_est = max(align, _round_up(2 * batch_size, align))
    temp_budget = max(vmem_cap // 5, 8 << 20)
    cap = temp_budget // (3 * 4 * r_est)
    cap = max(align, min(512, (cap // align) * align,
                         _round_up(batch_size, align)))
    best, best_score = align, None
    for rt in range(align, cap + 1, align):
        hp = _round_up(batch_size, rt)        # padded half size for this tile
        steps = (2 * hp) // rt
        score = hp + 2 * steps                # work ~ padded rows + step overhead
        if best_score is None or score <= best_score:
            best, best_score = rt, score      # tie-break: prefer larger tile
    return best


def _normalize_kernel(reps_ref, out_ref, *, scale):
    """Row-normalise and fold sqrt(1/T) into the embeddings (zero rows stay 0)."""
    x = reps_ref[...].astype(jnp.float32)
    norm = jnp.sqrt(jnp.sum(x * x, axis=-1, keepdims=True))
    # NOTE: eps clamp is per-row max(||x||, 1e-8) instead of on the product of
    # norms (torch.nn.CosineSimilarity); identical for non-degenerate rows.
    y = x * (jnp.float32(scale) / jnp.maximum(norm, jnp.float32(1e-8)))
    out_ref[...] = y.astype(out_ref.dtype)


def _ntxent_tile_kernel(cols_ref, out_ref, *, batch_size, half_pad, row_tile,
                        temperature, add_one_in_neg, n_pad):
    r = pl.program_id(0)
    rt = row_tile
    m = jnp.float32(1.0 / temperature)             # static LSE shift (cos <= 1)

    row0 = pl.multiple_of(r * rt, rt)
    in_first_half = row0 < half_pad
    # Positive partners live in the other (identically padded) half; tiles
    # never straddle halves because row_tile divides half_pad.
    pos0 = pl.multiple_of(
        jnp.where(in_first_half, row0 + half_pad, row0 - half_pad), rt)

    rows_g = cols_ref[pl.ds(row0, rt), :]          # (rt, D)  this tile's rows
    prow_g = cols_ref[pl.ds(pos0, rt), :]          # (rt, D)  positive partners
    rows_f = rows_g.astype(jnp.float32)
    prow_f = prow_g.astype(jnp.float32)
    cols_g = cols_ref[...]                         # (R, D)   all columns

    # One (rt, R) logits block per step; sqrt(1/T) is folded into both
    # operands so the Gram block is already cos_sim / T.
    logits = lax.dot_general(rows_g, cols_g, _DIMNUMS,
                             preferred_element_type=jnp.float32)

    s = jnp.sum(jnp.exp(logits - m), axis=-1, keepdims=True)     # (rt, 1)

    diag = jnp.sum(rows_f * rows_f, axis=-1, keepdims=True)      # ~ 1/T
    pos = jnp.sum(rows_f * prow_f, axis=-1, keepdims=True)       # cos+/T

    s = s - jnp.exp(diag - m)                      # drop self-similarity column
    if n_pad:
        # zero-padded columns each contribute exactly exp(0 - m)
        s = s - jnp.float32(n_pad) * jnp.exp(-m)
    if add_one_in_neg:
        # extra all-ones column: exp(1/T - m) == 1
        s = s + jnp.float32(1.0)

    ce = (m + jnp.log(s)) - pos                    # CE(label=0) per row

    # Mask padded rows.
    base = row0 - jnp.where(in_first_half, 0, half_pad)
    local = base + lax.broadcasted_iota(jnp.int32, (rt, 1), 0)
    valid = local < batch_size
    loss_p = jnp.sum(jnp.where(valid, ce, 0.0))
    pos_p = jnp.sum(jnp.where(valid, pos, 0.0))

    # One lane-dense (8, 128) store per step:
    #   sublane 0 -> sum(ce), sublane 1 -> sum(pos), rest zero.
    sub = lax.broadcasted_iota(jnp.int32, (8, 128), 0)
    out_ref[...] = jnp.where(sub == 0, loss_p,
                             jnp.where(sub == 1, pos_p, jnp.float32(0.0)))


def ntxent_loss(zis, zjs, zs=None, *, batch_size, temperature, beta,
                add_one_in_neg=False, gram_dtype=None):
    """Forward of NTXentLoss (use_cosine_similarity=True, exact_cov=False)."""
    # TODO(synk): exact_cov / exact_cov_unaug_sim branch of the PyTorch module
    # is not implemented; this kernel covers the standard NT-Xent CE branch.
    del zs
    b, d = zjs.shape
    assert b == batch_size and zis.shape == (b, d)
    zis = zis.astype(jnp.float32)
    zjs = zjs.astype(jnp.float32)

    # f32 Gram preserves 1e-4 accuracy; pass gram_dtype=jnp.bfloat16 for large-D
    # MXU-bound problems (validated below at loose tolerance).
    gram_dtype = jnp.float32 if gram_dtype is None else gram_dtype
    gram_sz = jnp.dtype(gram_dtype).itemsize
    align = 16 if gram_sz < 4 else 8

    cap = _vmem_capacity_bytes()
    rt = _pick_row_tile(b, cap, align)
    half_pad = _round_up(b, rt)
    n_rows = 2 * half_pad
    n_pad = n_rows - 2 * b
    n_steps = n_rows // rt

    pad = half_pad - b
    reps = jnp.concatenate(
        [jnp.pad(zjs, ((0, pad), (0, 0))), jnp.pad(zis, ((0, pad), (0, 0)))],
        axis=0)                                                   # (n_rows, d)

    scale = float(1.0 / np.sqrt(temperature))

    # ---- prep: normalise once into a single merged operand ------------------
    prep_limit = int(min(int(0.9 * cap),
                         max(32 << 20, 8 * rt * d * 4 + (2 << 20))))
    normed = pl.pallas_call(
        functools.partial(_normalize_kernel, scale=scale),
        out_shape=jax.ShapeDtypeStruct((n_rows, d), gram_dtype),
        grid_spec=pltpu.PrefetchScalarGridSpec(
            num_scalar_prefetch=0,
            grid=(n_steps,),
            in_specs=[pl.BlockSpec((rt, d), lambda r: (r, 0))],
            out_specs=pl.BlockSpec((rt, d), lambda r: (r, 0))),
        compiler_params=pltpu.CompilerParams(
            dimension_semantics=("parallel",),
            vmem_limit_bytes=prep_limit),
    )(reps)

    # ---- main: per-tile partial (loss, pos) sums, fully parallel grid --------
    kernel = functools.partial(
        _ntxent_tile_kernel, batch_size=b, half_pad=half_pad, row_tile=rt,
        temperature=float(temperature), add_one_in_neg=bool(add_one_in_neg),
        n_pad=n_pad)

    # TODO(synk): for very large 2B*D the resident (2B, D) column operand should
    # additionally be tiled along a second ("arbitrary") grid axis.
    col_bytes = n_rows * d * gram_sz
    step_bytes = 3 * rt * n_rows * 4 + 4 * rt * d * 4
    main_limit = int(min(int(0.9 * cap),
                         max(32 << 20, col_bytes + step_bytes + (4 << 20))))

    def run(col_spec):
        return pl.pallas_call(
            kernel,
            out_shape=jax.ShapeDtypeStruct((n_steps * 8, 128), jnp.float32),
            grid_spec=pltpu.PrefetchScalarGridSpec(
                num_scalar_prefetch=0,
                grid=(n_steps,),
                in_specs=[col_spec],
                out_specs=pl.BlockSpec((8, 128), lambda r: (r, 0))),
            compiler_params=pltpu.CompilerParams(
                dimension_semantics=("parallel",),
                vmem_limit_bytes=main_limit),
        )(normed)

    try:
        # Single-buffer the constant-index resident operand (identical every
        # step; double-buffering it only wastes VMEM).
        partials = run(pl.BlockSpec((n_rows, d), lambda r: (0, 0),
                                    pipeline_mode=pl.Buffered(1)))
    except Exception:
        partials = run(pl.BlockSpec((n_rows, d), lambda r: (0, 0)))

    p = partials.reshape(n_steps, 8, 128)
    denom = (1.0 + float(beta)) * 2.0 * b
    loss = jnp.sum(p[:, 0, 0]) / denom
    intra = -float(beta) * jnp.sum(p[:, 1, 0]) / denom
    return loss, intra


def _reference_numpy(zis, zjs, batch_size, temperature, beta,
                     add_one_in_neg=False):
    """Pure-numpy replica of the PyTorch forward (cosine sim, CE branch)."""
    reps = np.concatenate([np.asarray(zjs), np.asarray(zis)], axis=0)
    reps = reps.astype(np.float64)
    n2b = 2 * batch_size
    norms = np.sqrt(np.sum(reps * reps, axis=-1, keepdims=True))
    sim = (reps @ reps.T) / np.maximum(norms * norms.T, 1e-8)
    l_pos = np.diagonal(sim, offset=batch_size)
    r_pos = np.diagonal(sim, offset=-batch_size)
    pos = np.concatenate([l_pos, r_pos]).reshape(n2b, 1)
    mask = ~(np.eye(n2b, dtype=bool)
             | np.eye(n2b, k=batch_size, dtype=bool)
             | np.eye(n2b, k=-batch_size, dtype=bool))
    neg = sim[mask].reshape(n2b, -1)
    cols = [pos, neg]
    if add_one_in_neg:
        cols.append(np.ones((n2b, 1)))
    logits = np.concatenate(cols, axis=1) / temperature
    m = logits.max(axis=1, keepdims=True)
    lse = (m + np.log(np.sum(np.exp(logits - m), axis=1, keepdims=True)))[:, 0]
    ce = np.sum(lse - logits[:, 0])
    denom = (1.0 + beta) * n2b
    loss = ce / denom
    intra = (-np.sum(pos) * beta / temperature) / denom
    return loss, intra


if __name__ == "__main__":
    key = jax.random.PRNGKey(0)

    def _check(batch_size, feat_dim, temperature, beta, add_one, k,
               gram_dtype=None, rtol=1e-4, atol=1e-5):
        k1, k2 = jax.random.split(k)
        zis = jax.random.normal(k1, (batch_size, feat_dim), dtype=jnp.float32)
        zjs = jax.random.normal(k2, (batch_size, feat_dim), dtype=jnp.float32)
        loss, intra = ntxent_loss(
            zis, zjs, None, batch_size=batch_size, temperature=temperature,
            beta=beta, add_one_in_neg=add_one, gram_dtype=gram_dtype)
        loss = float(jax.block_until_ready(loss))
        intra = float(jax.block_until_ready(intra))
        ref_l, ref_i = _reference_numpy(zis, zjs, batch_size, temperature,
                                        beta, add_one)
        assert np.allclose(loss, ref_l, rtol=rtol, atol=atol), \
            ("loss", batch_size, feat_dim, loss, ref_l)
        assert np.allclose(intra, ref_i, rtol=rtol, atol=atol), \
            ("intra", batch_size, feat_dim, intra, ref_i)

    keys = jax.random.split(key, 5)
    _check(4, 32, 0.5, 0.5, False, keys[0])        # tiny (exercises row padding)
    _check(4, 32, 0.2, 0.25, True, keys[1])        # add_one_in_neg branch
    _check(640, 32, 0.5, 0.5, False, keys[2])      # multi-tile, divisor tile
    _check(300, 40, 0.5, 0.5, False, keys[3])      # non-divisible B -> padded tail
    _check(256, 512, 0.5, 0.5, False, keys[4],     # bf16 Gram path (larger D)
           gram_dtype=jnp.bfloat16, rtol=5e-3, atol=1e-3)

    print("KERNEL_OK")
</pallas_src>

<mosaic_0001>
module attributes {stable_mosaic.version = 11 : i64} {
  func.func @_normalize_kernel(%arg0: i32, %arg1: memref<8x32xf32, #tpu.memory_space<vmem>>, %arg2: memref<8x32xf32, #tpu.memory_space<vmem>>) attributes {dimension_semantics = [#tpu.dimension_semantics<parallel>], iteration_bounds = array<i64: 2>, scalar_prefetch = 0 : i64, scratch_operands = 0 : i64, tpu.core_type = #tpu.core_type<tc>, window_params = [{transform_indices = @transform_0, window_bounds = array<i64: 8, 32>}, {transform_indices = @transform_1, window_bounds = array<i64: 8, 32>}]} {
    %c0 = arith.constant 0 : index
    %c0_0 = arith.constant 0 : index
    %0 = vector.load %arg1[%c0, %c0_0] : memref<8x32xf32, #tpu.memory_space<vmem>>, vector<8x32xf32>
    %1 = arith.mulf %0, %0 : vector<8x32xf32>
    %cst = arith.constant dense<0.000000e+00> : vector<8xf32>
    %2 = vector.multi_reduction <add>, %1, %cst [1] : vector<8x32xf32> to vector<8xf32>
    %3 = vector.shape_cast %2 : vector<8xf32> to vector<8x1xf32>
    %4 = math.sqrt %3 : vector<8x1xf32>
    %cst_1 = arith.constant 9.99999993E-9 : f32
    %5 = vector.broadcast %cst_1 : f32 to vector<8x1xf32>
    %6 = arith.maximumf %4, %5 : vector<8x1xf32>
    %cst_2 = arith.constant 1.41421354 : f32
    %7 = vector.broadcast %cst_2 : f32 to vector<8x1xf32>
    %8 = arith.divf %7, %6 : vector<8x1xf32>
    %9 = vector.broadcast %8 : vector<8x1xf32> to vector<8x32xf32>
    %10 = arith.mulf %0, %9 : vector<8x32xf32>
    %c0_3 = arith.constant 0 : index
    %c0_4 = arith.constant 0 : index
    %11 = vector.load %arg2[%c0_3, %c0_4] : memref<8x32xf32, #tpu.memory_space<vmem>>, vector<8x32xf32>
    tpu.vector_store %arg2[%c0_3, %c0_4], %10 {strides = array<i32>} : memref<8x32xf32, #tpu.memory_space<vmem>>, vector<8x32xf32>,
    return
  }
  func.func @transform_0(%arg0: i32) -> (i32, i32) {
    %c0_i32 = arith.constant 0 : i32
    %c0_i32_0 = arith.constant 0 : i32
    return %arg0, %c0_i32 : i32, i32
  }
  func.func @transform_1(%arg0: i32) -> (i32, i32) {
    %c0_i32 = arith.constant 0 : i32
    %c0_i32_0 = arith.constant 0 : i32
    return %arg0, %c0_i32 : i32, i32
  }
}

</mosaic_0001>

<llo_original>
// kernel: tpu_custom_call.1
$region0: #{tpu_custom_call.1}
  #allocation0 [shape = 'u32[]', space=smem, size = 0x4, offset = 0x4, fixed_abs, tag = 'smem constant byte address 0x4 - core index']
  #allocation1 [shape = 'u32[144,128]{1,0:T(1,128)}', space=vmem, size = 0x12000, scoped, tag = 'internal scratch']
  %s0 = inlined_call_operand.hbm [shape: f32[16,32], index: 0, kind: input, shape index: {}]
  %s1 = inlined_call_operand.hbm [shape: f32[16,32], index: 1, kind: output, shape index: {}]
  %s2 = sld [smem:[#allocation0]]
  $region41: #{tpu_custom_call.1} parent=0
    _
  %s4 = ssub.s32 1, %s2
  %s5 = scalar_select 0, %s4, %s2
  $region1: #{tpu_custom_call.1} parent=0
    #allocation2 [shape = 'u8[8192]{0}', space=vmem, size = 0x2000, scoped, tag = 'input window, operand 0']
    #allocation3 [shape = 's32[2]{0}', space=sflag, size = 0x8, scoped, tag = 'scoped memory for tpu_custom_call.1']
    #allocation4 [shape = 's32[2]{0}', space=sflag, size = 0x8, scoped, tag = 'scoped memory for tpu_custom_call.1']
    #allocation5 [shape = 'u8[8192]{0}', space=vmem, size = 0x2000, scoped, tag = 'output window, operand 0']
    %6 = vsyncpa [#allocation3], 0
    %s7 = scalar_lea.sflag [#allocation3], 1
    %8 = vsyncpa %s7, 0
    %9 = vsyncpa [#allocation4], 0
    %s10 = scalar_lea.sflag [#allocation4], 1
    %11 = vsyncpa %s10, 0
    loop: start=0, step=1, limit=4
    $region2: #{tpu_custom_call.1} parent=1 // loop_pre_header
      _
    $region3: #{tpu_custom_call.1} parent=1 // loop_header
      %s13 = sphi 0, %s17
      %p14 = scmp.ge.s32.totalorder %s13, 4
      %s23 = sphi 0, %s25
      %s26 = sphi 0, %s23
      %s27 = sphi 0, %s26
      %s43 = sphi 0, %s27
      %s49 = sphi 0, %s51
      %s52 = sphi 0, %s49
      %s53 = sphi 0, %s52
      %s69 = sphi 0, %s53
    $region4: #{tpu_custom_call.1} parent=1 // loop_header_branch
      %16 = sbr.rel (%p14) target = $region8
    $region5: #{tpu_custom_call.1} parent=1 // loop_body
      %s18 = ssub.s32 %s13, 1
      %s19 = ssub.s32 %s13, 2
      %s20 = sadd.s32 %s13, 1
      %s21 = ssub.s32 %s13, %s20
      %p22 = scmp.eq.s32.totalorder %s21, 0
      %s24 = sadd.s32 %s23, 1
      %s25 = scalar_select %p22, %s23, %s24
      %p28 = pneg %p22
      %p29 = scmp.eq.s32.totalorder %s13, 1
      %p30 = por %p28, %p29
      %p31 = scmp.ne.s32.totalorder %s23, %s26
      %p32 = scmp.eq.s32.totalorder %s13, 0
      %p33 = por %p31, %p32
      %p34 = scmp.ne.s32.totalorder %s23, %s26
      %p35 = scmp.eq.s32.totalorder %s18, 1
      %p36 = por %p34, %p35
      %p37 = scmp.ne.s32.totalorder %s26, %s27
      %p38 = scmp.eq.s32.totalorder %s18, 0
      %p39 = por %p37, %p38
      %p40 = scmp.ne.s32.totalorder %s26, %s27
      %p41 = scmp.eq.s32.totalorder %s19, 1
      %p42 = por %p40, %p41
      %p44 = scmp.ne.s32.totalorder %s27, %s43
      %p45 = scmp.eq.s32.totalorder %s19, 0
      %p46 = por %p44, %p45
      %s47 = ssub.s32 %s13, %s20
      %p48 = scmp.eq.s32.totalorder %s47, 0
      %s50 = sadd.s32 %s49, 1
      %s51 = scalar_select %p48, %s49, %s50
      %p54 = pneg %p48
      %p55 = scmp.eq.s32.totalorder %s13, 1
      %p56 = por %p54, %p55
      %p57 = scmp.ne.s32.totalorder %s49, %s52
      %p58 = scmp.eq.s32.totalorder %s13, 0
      %p59 = por %p57, %p58
      %p60 = scmp.ne.s32.totalorder %s49, %s52
      %p61 = scmp.eq.s32.totalorder %s18, 1
      %p62 = por %p60, %p61
      %p63 = scmp.ne.s32.totalorder %s52, %s53
      %p64 = scmp.eq.s32.totalorder %s18, 0
      %p65 = por %p63, %p64
      %p66 = scmp.ne.s32.totalorder %s52, %s53
      %p67 = scmp.eq.s32.totalorder %s19, 1
      %p68 = por %p66, %p67
      %p70 = scmp.ne.s32.totalorder %s53, %s69
      %p71 = scmp.eq.s32.totalorder %s19, 0
      %p72 = por %p70, %p71
      %p73 = scmp.le.s32.totalorder 1, %s13
      %p74 = scmp.lt.s32.totalorder %s13, 3
      %p75 = pnand %p73, %p74
      %p76 = pneg %p75
      // Predicated region
      $region9: #{tpu_custom_call.1} parent=5 // pred_check
        _
      $region10: #{tpu_custom_call.1} parent=5 // pred_check_branch
        %78 = sbr.rel (%p75) target = $region12
      $region11: #{tpu_custom_call.1} parent=5 // pred_region
        %s79 = ssub.s32 %s13, 1
      $region12: #{tpu_custom_call.1} parent=5 // pred_fallthru
        _
      %p80 = scmp.lt.s32.totalorder %s13, 2
      // Predicated region
      $region13: #{tpu_custom_call.1} parent=5 // pred_check
        %p81 = pneg %p80
      $region14: #{tpu_custom_call.1} parent=5 // pred_check_branch
        %83 = sbr.rel (%p81) target = $region16
      $region15: #{tpu_custom_call.1} parent=5 // pred_region
        // Predicated region
        $region17: #{tpu_custom_call.1} parent=15 // pred_check
          %p84 = pneg %p33
        $region18: #{tpu_custom_call.1} parent=15 // pred_check_branch
          %86 = sbr.rel (%p84) target = $region20
        $region19: #{tpu_custom_call.1} parent=15 // pred_region
          %s87 = sand.u32 %s23, 1
          %s88 = scalar_lea.sflag [#allocation3], %s87
          %s89 = sand.u32 %s23, 1
          %s90 = smul.addr %s89, 8
          %s91 = scalar_lea.vmem [#allocation2], %s90
          %s93 = ssub.s32 128, 128
          %94 = vsyncadd %s88, %s93
          %s95 = smul.addr %s13, 128
          %s96 = scalar_lea.hbm %s0, %s95
          %s98 = sshll.u32 %s91, 4
          %s99 = int_to_ptr.vmem [resolvable:$true] %s98
          %101 = dma.hbm_to_vmem [thread:$0]  %s96, 128, %s99, %s88
        $region20: #{tpu_custom_call.1} parent=15 // pred_fallthru
          _
      $region16: #{tpu_custom_call.1} parent=5 // pred_fallthru
        _
      %p102 = scmp.le.s32.totalorder 1, %s13
      %p103 = scmp.lt.s32.totalorder %s13, 3
      %p104 = pnand %p102, %p103
      %p105 = pneg %p104
      // Predicated region
      $region21: #{tpu_custom_call.1} parent=5 // pred_check
        _
      $region22: #{tpu_custom_call.1} parent=5 // pred_check_branch
        %107 = sbr.rel (%p104) target = $region24
      $region23: #{tpu_custom_call.1} parent=5 // pred_region
        %s108 = ssub.s32 %s13, 1
        %s109 = sand.u32 %s26, 1
        %s110 = scalar_lea.sflag [#allocation3], %s109
        %s111 = sand.u32 %s26, 1
        %s112 = smul.addr %s111, 8
        %s113 = scalar_lea.vmem [#allocation2], %s112
        // Predicated region
        $region25: #{tpu_custom_call.1} parent=23 // pred_check
          %p114 = pneg %p39
        $region26: #{tpu_custom_call.1} parent=23 // pred_check_branch
          %116 = sbr.rel (%p114) target = $region28
        $region27: #{tpu_custom_call.1} parent=23 // pred_region
          %117 = dma.done %s110, 128
        $region28: #{tpu_custom_call.1} parent=23 // pred_fallthru
          _
        %s118 = sand.u32 %s26, 1
        %s119 = scalar_lea.sflag [#allocation3], %s118
        %s120 = sand.u32 %s26, 1
        %s121 = smul.addr %s120, 8
        %s122 = scalar_lea.vmem [#allocation2], %s121
        %p123 = pneg %p39
        %p124 = pneg %p36
        %p125 = pneg %p65
        %p126 = pneg %p62
        %s127 = sand.u32 %s52, 1
        %s128 = scalar_lea.sflag [#allocation4], %s127
        %s129 = sand.u32 %s52, 1
        %s130 = smul.addr %s129, 8
        %s131 = scalar_lea.vmem [#allocation5], %s130
        %v132 = vld [vmem:[%s113] sm:$0xff]
        %v133 = vmul.f32 %v132, %v132
        %vm134 = vcmask 261120
        %v135 = vsel %vm134, %v133, 0.0
        %136 = vadd.xlane.f32.xlu0 %v135
        %v137 = vpop.xlane.xlu0 %136
        %v138 = vrsqrt.pop %v137
        %v139 = vmul.f32 %v137, %v138
        %vm140 = vcmp.eq.f32.partialorder %v137, inf
        %v141 = vsel %vm140, %v137, %v139
        %vm142 = vcmp.eq.f32.partialorder %v137, 0.0
        %v143 = vand.u32 %v137, 2147483648
        %v144 = vsel %vm142, %v143, %v141
        %v145 = vmax.f32 %v144, 1e-08
        %v146 = vrcp.pop %v145
        %v147 = vmul.f32 1.4142135, %v146
        %v148 = vmul.f32 %v132, %v147
        %149 = vst.msk [vmem:[%s131] sm:$0xff] %vm134, %v148
        %s150 = sand.u32 %s52, 1
        %s151 = scalar_lea.sflag [#allocation4], %s150
        %s152 = sand.u32 %s52, 1
        %s153 = smul.addr %s152, 8
        %s154 = scalar_lea.vmem [#allocation5], %s153
        // Predicated region
        $region29: #{tpu_custom_call.1} parent=23 // pred_check
          %p155 = pneg %p62
        $region30: #{tpu_custom_call.1} parent=23 // pred_check_branch
          %157 = sbr.rel (%p155) target = $region32
        $region31: #{tpu_custom_call.1} parent=23 // pred_region
          %s159 = ssub.s32 128, 128
          %160 = vsyncadd %s151, %s159
          %s161 = smul.addr %s18, 128
          %s162 = scalar_lea.hbm %s1, %s161
          %s164 = sshll.u32 %s154, 4
          %s165 = int_to_ptr.vmem [resolvable:$true] %s164
          %167 = dma.vmem_to_hbm [thread:$0]  %s165, 128, %s162, %s151
        $region32: #{tpu_custom_call.1} parent=23 // pred_fallthru
          _
      $region24: #{tpu_custom_call.1} parent=5 // pred_fallthru
        _
      %p168 = scmp.le.s32.totalorder 2, %s13
      // Predicated region
      $region33: #{tpu_custom_call.1} parent=5 // pred_check
        %p169 = pneg %p168
      $region34: #{tpu_custom_call.1} parent=5 // pred_check_branch
        %171 = sbr.rel (%p169) target = $region36
      $region35: #{tpu_custom_call.1} parent=5 // pred_region
        %s172 = ssub.s32 %s13, 2
        // Predicated region
        $region37: #{tpu_custom_call.1} parent=35 // pred_check
          %p173 = pneg %p68
        $region38: #{tpu_custom_call.1} parent=35 // pred_check_branch
          %175 = sbr.rel (%p173) target = $region40
        $region39: #{tpu_custom_call.1} parent=35 // pred_region
          %s176 = sand.u32 %s53, 1
          %s177 = scalar_lea.sflag [#allocation4], %s176
          %s178 = sand.u32 %s53, 1
          %s179 = smul.addr %s178, 8
          %s180 = scalar_lea.vmem [#allocation5], %s179
          %181 = dma.done %s177, 128
        $region40: #{tpu_custom_call.1} parent=35 // pred_fallthru
          _
      $region36: #{tpu_custom_call.1} parent=5 // pred_fallthru
        _
    $region6: #{tpu_custom_call.1} parent=1 // loop_footer
      %s17 = sadd.s32 1, %s13
    $region7: #{tpu_custom_call.1} parent=1 // loop_footer_branch
      %12 = sbr.rel target = $region3
    $region8: #{tpu_custom_call.1} parent=1 // loop_exit
      _
    %182 = vsyncpa [#allocation3], 1
    %s183 = scalar_lea.sflag [#allocation3], 1
    %184 = vsyncpa %s183, 1
    %185 = vsyncpa [#allocation4], 1
    %s186 = scalar_lea.sflag [#allocation4], 1
    %187 = vsyncpa %s186, 1

</llo_original>
